<compile_context>
chip_gen: v7x
topology: tpu7x:2x2x1
jax: 0.10.0
libtpu: 0.0.40
codegen_flags: <defaults>
</compile_context>

<pallas_src>
from functools import partial

import jax
import jax.numpy as jnp
import numpy as np
from jax.experimental import pallas as pl
from jax.experimental.pallas import tpu as pltpu


def _unfold_nchw(x, k, stride, padding):
    """im2col matching torch.nn.functional.unfold, in (b, C*k*k, L) layout."""
    b, c, H, W = x.shape
    xp = jnp.pad(x, ((0, 0), (0, 0), (padding, padding), (padding, padding)))
    nH = (H + 2 * padding - k) // stride + 1
    nW = (W + 2 * padding - k) // stride + 1
    cols = []
    for ki in range(k):
        for kj in range(k):
            cols.append(xp[:, :, ki:ki + stride * nH:stride, kj:kj + stride * nW:stride])
    patches = jnp.stack(cols, axis=2)                  # (b, c, k*k, nH, nW)
    patches = patches.reshape(b, c * k * k, nH * nW)   # unfold layout, L last
    return patches, nH, nW


def _laconv_kernel(n_channels, elementwise_bf16,
                   p_ref, wa1_ref, ba1_ref, wa2_ref, ba2_ref,
                   wa3_ref, ba3_ref, wm_ref, bias_ref, o_ref):
    """One (batch, L-tile) grid point, all L-last (lane dense).

    p_ref    : (1, ckk, TL) bf16   im2col patches
    wa1_ref  : (kk, ckk)    bf16   attention1 conv1 weight
    wa2/wa3  : (kk, kk)     bf16   attention1 1x1 conv weights
    ba*_ref  : (kk, 1)      f32    attention1 biases
    wm_ref   : (m, ckk)     bf16   main conv weight
    bias_ref : (1, m, 1)    f32    attention3 bias (per batch)
    o_ref    : (1, m, TL)   f32
    """
    p = p_ref[0]                                                   # (ckk, TL) bf16

    # attention1: the kxk conv shares the same im2col patches as the main conv.
    a = jnp.dot(wa1_ref[...], p, preferred_element_type=jnp.float32) + ba1_ref[...]
    a = jnp.maximum(a, 0.0)
    a = jnp.dot(wa2_ref[...], a.astype(jnp.bfloat16),
                preferred_element_type=jnp.float32) + ba2_ref[...]
    a = jnp.maximum(a, 0.0)
    a = jnp.dot(wa3_ref[...], a.astype(jnp.bfloat16),
                preferred_element_type=jnp.float32) + ba3_ref[...]
    a = jax.nn.sigmoid(a)                                          # (kk, TL) f32

    # Repeat attention over input channels along the SUBLANE axis:
    # atw[c*kk + j, :] = a[j, :]  -- matches unfold's channel-major flattening.
    if elementwise_bf16:
        # v6e/v7x: bf16 VALU -> tile/multiply in bf16, no full-slab up/downcasts.
        atw = jnp.tile(a.astype(jnp.bfloat16), (n_channels, 1))    # (ckk, TL) bf16
        atx = atw * p                                              # bf16 elementwise
    else:
        # v5e: no bf16 VPU, keep elementwise math in f32.
        atw = jnp.tile(a, (n_channels, 1))                         # (ckk, TL) f32
        atx = atw * p.astype(jnp.float32)

    y = jnp.dot(wm_ref[...], atx.astype(jnp.bfloat16),
                preferred_element_type=jnp.float32)                # (m, TL) f32
    y = y + bias_ref[0]                                            # (m, 1) broadcast
    o_ref[0] = y


def laconv2d_forward(x, params, kernel_size, stride, padding,
                     l_tile=None, elementwise_bf16=None):
    b, n, H, W = x.shape
    k = kernel_size
    kk = k * k
    m = params["weight"].shape[0]
    ckk = n * kk

    if elementwise_bf16 is None:
        try:
            kind = jax.devices()[0].device_kind.lower()
        except Exception:
            kind = ""
        # bf16 VALU only on v6e / v7x; v5e (and older) keep f32 elementwise math.
        elementwise_bf16 = ("v6" in kind) or ("v7" in kind)

    # TODO(synk): at production sizes, build the (ckk, L_tile) patch slab
    # in-kernel from a DMA'd (1, n, tileH + 2*pad, W + 2*pad) slab of the
    # padded input to cut the K^2-expanded im2col round-trip through HBM.
    x_bf16 = x.astype(jnp.bfloat16)       # cast BEFORE unfold: halves im2col HBM traffic
    patches, nH, nW = _unfold_nchw(x_bf16, k, stride, padding)     # (b, ckk, L) bf16
    L = nH * nW

    if l_tile is None:
        # Big lane tile (fills the 256-wide MXU N dim on v6e/v7x, amortizes
        # per-step overhead) but keep >= 2 L-tiles for pipeline depth.
        l_tile = 512
        while l_tile > 128 and pl.cdiv(L, l_tile) < 2:
            l_tile //= 2
    n_lt = pl.cdiv(L, l_tile)
    Lp = n_lt * l_tile
    if Lp != L:
        patches = jnp.pad(patches, ((0, 0), (0, 0), (0, Lp - L)))

    # Conv weights -> L-last matmul form; bf16 for full-rate MXU.
    wa1 = params["a1_w"].reshape(kk, ckk).astype(jnp.bfloat16)
    ba1 = params["a1_b"].reshape(kk, 1)
    wa2 = params["a2_w"].reshape(kk, kk).astype(jnp.bfloat16)
    ba2 = params["a2_b"].reshape(kk, 1)
    wa3 = params["a3_w"].reshape(kk, kk).astype(jnp.bfloat16)
    ba3 = params["a3_b"].reshape(kk, 1)
    wm = params["weight"].reshape(m, ckk).astype(jnp.bfloat16)

    # attention3 bias path (global avg pool + two 1x1 convs on tiny (b, n)
    # vectors) -> plain JAX glue; fed per-batch to the kernel as (b, m, 1).
    xm = x.mean(axis=(2, 3))                                       # (b, n) f32
    h = jnp.maximum(xm @ params["b1_w"].reshape(m, n).T + params["b1_b"], 0.0)
    bias = (h @ params["b2_w"].reshape(m, m).T + params["b2_b"]).reshape(b, m, 1)

    flops = 2 * b * Lp * (kk * ckk + 2 * kk * kk + m * ckk)
    bytes_accessed = (patches.size * 2
                      + (wa1.size + wa2.size + wa3.size + wm.size) * 2
                      + (ba1.size + ba2.size + ba3.size + bias.size) * 4
                      + b * m * Lp * 4)
    cost = pl.CostEstimate(flops=flops,
                           transcendentals=b * Lp * kk,
                           bytes_accessed=bytes_accessed)

    # Explicit scoped-VMEM budget: double-buffered patch + output tiles,
    # resident weights, and in-kernel atw/atx temporaries, with headroom.
    per_step_bytes = (2 * ckk * l_tile * 2            # 2x patch buffer (bf16)
                      + 2 * m * l_tile * 4            # 2x output buffer (f32)
                      + 4 * ckk * l_tile * 4          # atw/atx/a temporaries headroom
                      + (wa1.size + wa2.size + wa3.size + wm.size) * 2 * 2)
    vmem_limit = int(min(max(2 * per_step_bytes, 32 * 1024 * 1024),
                         48 * 1024 * 1024))           # stay under v7x 64 MiB physical

    out = pl.pallas_call(
        partial(_laconv_kernel, n, elementwise_bf16),
        out_shape=jax.ShapeDtypeStruct((b, m, Lp), jnp.float32),
        grid_spec=pltpu.PrefetchScalarGridSpec(
            num_scalar_prefetch=0,
            grid=(b, n_lt),
            in_specs=[
                pl.BlockSpec((1, ckk, l_tile), lambda i, j: (i, 0, j)),  # patches
                pl.BlockSpec((kk, ckk), lambda i, j: (0, 0)),            # attn1 conv1 W
                pl.BlockSpec((kk, 1), lambda i, j: (0, 0)),              # attn1 conv1 b
                pl.BlockSpec((kk, kk), lambda i, j: (0, 0)),             # attn1 conv2 W
                pl.BlockSpec((kk, 1), lambda i, j: (0, 0)),              # attn1 conv2 b
                pl.BlockSpec((kk, kk), lambda i, j: (0, 0)),             # attn1 conv3 W
                pl.BlockSpec((kk, 1), lambda i, j: (0, 0)),              # attn1 conv3 b
                pl.BlockSpec((m, ckk), lambda i, j: (0, 0)),             # main conv W
                pl.BlockSpec((1, m, 1), lambda i, j: (i, 0, 0)),         # attention3 bias
            ],
            out_specs=pl.BlockSpec((1, m, l_tile), lambda i, j: (i, 0, j)),
        ),
        compiler_params=pltpu.CompilerParams(
            dimension_semantics=("parallel", "parallel"),
            vmem_limit_bytes=vmem_limit),
        cost_estimate=cost,
    )(patches, wa1, ba1, wa2, ba2, wa3, ba3, wm, bias)

    # (b, m, L) -> NCHW is a free reshape (no transpose needed).
    y = out[:, :, :L].reshape(b, m, nH, nW)
    return y


def laconv2d_reference(x, params, kernel_size, stride, padding):
    """Pure-jnp f32 reference mirroring the PyTorch forward (for validation)."""
    b, n, H, W = x.shape
    k = kernel_size
    kk = k * k
    m = params["weight"].shape[0]
    ckk = n * kk
    patches, nH, nW = _unfold_nchw(x, k, stride, padding)          # (b, ckk, L) f32
    pT = patches.transpose(0, 2, 1)                                # (b, L, ckk)
    a = jnp.maximum(pT @ params["a1_w"].reshape(kk, ckk).T + params["a1_b"], 0.0)
    a = jnp.maximum(a @ params["a2_w"].reshape(kk, kk).T + params["a2_b"], 0.0)
    a = jax.nn.sigmoid(a @ params["a3_w"].reshape(kk, kk).T + params["a3_b"])
    atw = jnp.tile(a, (1, 1, n))
    atx = atw * pT
    y = atx @ params["weight"].reshape(m, ckk).T                   # (b, L, m)
    xm = x.mean(axis=(2, 3))
    h = jnp.maximum(xm @ params["b1_w"].reshape(m, n).T + params["b1_b"], 0.0)
    bias = h @ params["b2_w"].reshape(m, m).T + params["b2_b"]     # (b, m)
    y = y + bias[:, None, :]
    return y.transpose(0, 2, 1).reshape(b, m, nH, nW)


if __name__ == "__main__":
    # Module config: LAConv2D(in_planes=4, out_planes=8, kernel_size=3,
    #                         stride=1, padding=1, use_bias=True)
    b, n, m, k = 2, 4, 8, 3
    H = W = 16
    stride, padding = 1, 1
    kk = k * k

    key = jax.random.PRNGKey(0)
    keys = jax.random.split(key, 12)
    s = 0.1
    params = {
        # attention1: Conv2d(n, k^2, k) -> ReLU -> Conv2d(k^2, k^2, 1) -> ReLU
        #             -> Conv2d(k^2, k^2, 1) -> Sigmoid
        "a1_w": jax.random.normal(keys[0], (kk, n, k, k), jnp.float32) * s,
        "a1_b": jax.random.normal(keys[1], (kk,), jnp.float32) * s,
        "a2_w": jax.random.normal(keys[2], (kk, kk, 1, 1), jnp.float32) * s,
        "a2_b": jax.random.normal(keys[3], (kk,), jnp.float32) * s,
        "a3_w": jax.random.normal(keys[4], (kk, kk, 1, 1), jnp.float32) * s,
        "a3_b": jax.random.normal(keys[5], (kk,), jnp.float32) * s,
        # attention3: AdaptiveAvgPool2d(1) -> Conv2d(n, m, 1) -> ReLU -> Conv2d(m, m, 1)
        "b1_w": jax.random.normal(keys[6], (m, n, 1, 1), jnp.float32) * s,
        "b1_b": jax.random.normal(keys[7], (m,), jnp.float32) * s,
        "b2_w": jax.random.normal(keys[8], (m, m, 1, 1), jnp.float32) * s,
        "b2_b": jax.random.normal(keys[9], (m,), jnp.float32) * s,
        # main conv weight (forward never uses conv1's bias)
        "weight": jax.random.normal(keys[10], (m, n, k, k), jnp.float32) * s,
    }
    x = jax.random.normal(keys[11], (b, n, H, W), jnp.float32)

    y = laconv2d_forward(x, params, k, stride, padding)
    y = jax.block_until_ready(y)

    y_ref = laconv2d_reference(x, params, k, stride, padding)
    assert y.shape == (b, m, H, W), y.shape
    # bf16 MXU operands / bf16 elementwise (f32 accumulation) -> loosened
    # tolerance vs the f32 reference.
    np.testing.assert_allclose(np.asarray(y), np.asarray(y_ref), rtol=2e-2, atol=2e-2)

    print("KERNEL_OK")
</pallas_src>

<mosaic_0001>
module attributes {stable_mosaic.version = 11 : i64} {
  func.func @_laconv_kernel(%arg0: i32, %arg1: i32, %arg2: memref<1x36x128xbf16, #tpu.memory_space<vmem>>, %arg3: memref<9x36xbf16, #tpu.memory_space<vmem>>, %arg4: memref<9x1xf32, #tpu.memory_space<vmem>>, %arg5: memref<9x9xbf16, #tpu.memory_space<vmem>>, %arg6: memref<9x1xf32, #tpu.memory_space<vmem>>, %arg7: memref<9x9xbf16, #tpu.memory_space<vmem>>, %arg8: memref<9x1xf32, #tpu.memory_space<vmem>>, %arg9: memref<8x36xbf16, #tpu.memory_space<vmem>>, %arg10: memref<1x8x1xf32, #tpu.memory_space<vmem>>, %arg11: memref<1x8x128xf32, #tpu.memory_space<vmem>>) attributes {dimension_semantics = [#tpu.dimension_semantics<parallel>, #tpu.dimension_semantics<parallel>], iteration_bounds = array<i64: 2, 2>, scalar_prefetch = 0 : i64, scratch_operands = 0 : i64, tpu.core_type = #tpu.core_type<tc>, window_params = [{transform_indices = @transform_0, window_bounds = array<i64: 1, 36, 128>}, {pipeline_mode = #tpu.pipeline_mode<synchronous>, transform_indices = @transform_1, window_bounds = array<i64: 9, 36>}, {pipeline_mode = #tpu.pipeline_mode<synchronous>, transform_indices = @transform_2, window_bounds = array<i64: 9, 1>}, {pipeline_mode = #tpu.pipeline_mode<synchronous>, transform_indices = @transform_3, window_bounds = array<i64: 9, 9>}, {pipeline_mode = #tpu.pipeline_mode<synchronous>, transform_indices = @transform_4, window_bounds = array<i64: 9, 1>}, {pipeline_mode = #tpu.pipeline_mode<synchronous>, transform_indices = @transform_5, window_bounds = array<i64: 9, 9>}, {pipeline_mode = #tpu.pipeline_mode<synchronous>, transform_indices = @transform_6, window_bounds = array<i64: 9, 1>}, {pipeline_mode = #tpu.pipeline_mode<synchronous>, transform_indices = @transform_7, window_bounds = array<i64: 8, 36>}, {transform_indices = @transform_8, window_bounds = array<i64: 1, 8, 1>}, {transform_indices = @transform_9, window_bounds = array<i64: 1, 8, 128>}]} {
    %c0 = arith.constant 0 : index
    %c0_0 = arith.constant 0 : index
    %c0_1 = arith.constant 0 : index
    %0 = vector.load %arg2[%c0, %c0_0, %c0_1] : memref<1x36x128xbf16, #tpu.memory_space<vmem>>, vector<1x36x128xbf16>
    %1 = vector.shape_cast %0 : vector<1x36x128xbf16> to vector<36x128xbf16>
    %c0_2 = arith.constant 0 : index
    %c0_3 = arith.constant 0 : index
    %2 = vector.load %arg3[%c0_2, %c0_3] : memref<9x36xbf16, #tpu.memory_space<vmem>>, vector<9x36xbf16>
    %cst = arith.constant dense<0.000000e+00> : vector<9x128xf32>
    %3 = tpu.matmul %2, %1, %cst {dimension_numbers = #tpu.dot_dimension_numbers<[1], [0], [0], [1], [0, 0, 1, 1], [], []>} : vector<9x36xbf16>, vector<36x128xbf16>, vector<9x128xf32> -> vector<9x128xf32>
    %c0_4 = arith.constant 0 : index
    %c0_5 = arith.constant 0 : index
    %4 = vector.load %arg4[%c0_4, %c0_5] : memref<9x1xf32, #tpu.memory_space<vmem>>, vector<9x1xf32>
    %5 = vector.broadcast %4 : vector<9x1xf32> to vector<9x128xf32>
    %6 = arith.addf %3, %5 : vector<9x128xf32>
    %cst_6 = arith.constant 0.000000e+00 : f32
    %7 = vector.broadcast %cst_6 : f32 to vector<9x128xf32>
    %8 = arith.maximumf %6, %7 : vector<9x128xf32>
    %c0_7 = arith.constant 0 : index
    %c0_8 = arith.constant 0 : index
    %9 = vector.load %arg5[%c0_7, %c0_8] : memref<9x9xbf16, #tpu.memory_space<vmem>>, vector<9x9xbf16>
    %10 = arith.truncf %8 : vector<9x128xf32> to vector<9x128xbf16>
    %cst_9 = arith.constant dense<0.000000e+00> : vector<9x128xf32>
    %11 = tpu.matmul %9, %10, %cst_9 {dimension_numbers = #tpu.dot_dimension_numbers<[1], [0], [0], [1], [0, 0, 1, 1], [], []>} : vector<9x9xbf16>, vector<9x128xbf16>, vector<9x128xf32> -> vector<9x128xf32>
    %c0_10 = arith.constant 0 : index
    %c0_11 = arith.constant 0 : index
    %12 = vector.load %arg6[%c0_10, %c0_11] : memref<9x1xf32, #tpu.memory_space<vmem>>, vector<9x1xf32>
    %13 = vector.broadcast %12 : vector<9x1xf32> to vector<9x128xf32>
    %14 = arith.addf %11, %13 : vector<9x128xf32>
    %cst_12 = arith.constant 0.000000e+00 : f32
    %15 = vector.broadcast %cst_12 : f32 to vector<9x128xf32>
    %16 = arith.maximumf %14, %15 : vector<9x128xf32>
    %c0_13 = arith.constant 0 : index
    %c0_14 = arith.constant 0 : index
    %17 = vector.load %arg7[%c0_13, %c0_14] : memref<9x9xbf16, #tpu.memory_space<vmem>>, vector<9x9xbf16>
    %18 = arith.truncf %16 : vector<9x128xf32> to vector<9x128xbf16>
    %cst_15 = arith.constant dense<0.000000e+00> : vector<9x128xf32>
    %19 = tpu.matmul %17, %18, %cst_15 {dimension_numbers = #tpu.dot_dimension_numbers<[1], [0], [0], [1], [0, 0, 1, 1], [], []>} : vector<9x9xbf16>, vector<9x128xbf16>, vector<9x128xf32> -> vector<9x128xf32>
    %c0_16 = arith.constant 0 : index
    %c0_17 = arith.constant 0 : index
    %20 = vector.load %arg8[%c0_16, %c0_17] : memref<9x1xf32, #tpu.memory_space<vmem>>, vector<9x1xf32>
    %21 = vector.broadcast %20 : vector<9x1xf32> to vector<9x128xf32>
    %22 = arith.addf %19, %21 : vector<9x128xf32>
    %23 = arith.negf %22 : vector<9x128xf32>
    %24 = math.exp %23 : vector<9x128xf32>
    %cst_18 = arith.constant 1.000000e+00 : f32
    %25 = vector.broadcast %cst_18 : f32 to vector<9x128xf32>
    %26 = arith.addf %25, %24 : vector<9x128xf32>
    %27 = arith.divf %25, %26 : vector<9x128xf32>
    %28 = tpu.concatenate %27, %27, %27, %27 in 0 : vector<9x128xf32>, vector<9x128xf32>, vector<9x128xf32>, vector<9x128xf32> -> vector<36x128xf32>
    %29 = arith.extf %1 : vector<36x128xbf16> to vector<36x128xf32>
    %30 = arith.mulf %28, %29 : vector<36x128xf32>
    %c0_19 = arith.constant 0 : index
    %c0_20 = arith.constant 0 : index
    %31 = vector.load %arg9[%c0_19, %c0_20] : memref<8x36xbf16, #tpu.memory_space<vmem>>, vector<8x36xbf16>
    %32 = arith.truncf %30 : vector<36x128xf32> to vector<36x128xbf16>
    %cst_21 = arith.constant dense<0.000000e+00> : vector<8x128xf32>
    %33 = tpu.matmul %31, %32, %cst_21 {dimension_numbers = #tpu.dot_dimension_numbers<[1], [0], [0], [1], [0, 0, 1, 1], [], []>} : vector<8x36xbf16>, vector<36x128xbf16>, vector<8x128xf32> -> vector<8x128xf32>
    %c0_22 = arith.constant 0 : index
    %c0_23 = arith.constant 0 : index
    %c0_24 = arith.constant 0 : index
    %34 = vector.load %arg10[%c0_22, %c0_23, %c0_24] : memref<1x8x1xf32, #tpu.memory_space<vmem>>, vector<1x8x1xf32>
    %35 = vector.shape_cast %34 : vector<1x8x1xf32> to vector<8x1xf32>
    %36 = vector.broadcast %35 : vector<8x1xf32> to vector<8x128xf32>
    %37 = arith.addf %33, %36 : vector<8x128xf32>
    %c0_25 = arith.constant 0 : index
    %c0_26 = arith.constant 0 : index
    %c0_27 = arith.constant 0 : index
    %38 = vector.load %arg11[%c0_25, %c0_26, %c0_27] : memref<1x8x128xf32, #tpu.memory_space<vmem>>, vector<1x8x128xf32>
    %39 = vector.shape_cast %38 : vector<1x8x128xf32> to vector<8x128xf32>
    %40 = vector.shape_cast %37 : vector<8x128xf32> to vector<1x8x128xf32>
    tpu.vector_store %arg11[%c0_25, %c0_26, %c0_27], %40 {strides = array<i32>} : memref<1x8x128xf32, #tpu.memory_space<vmem>>, vector<1x8x128xf32>,
    return
  }
  func.func @transform_0(%arg0: i32, %arg1: i32) -> (i32, i32, i32) {
    %c0_i32 = arith.constant 0 : i32
    %c0_i32_0 = arith.constant 0 : i32
    return %arg0, %c0_i32, %arg1 : i32, i32, i32
  }
  func.func @transform_1(%arg0: i32, %arg1: i32) -> (i32, i32) {
    %c0_i32 = arith.constant 0 : i32
    %c0_i32_0 = arith.constant 0 : i32
    %c0_i32_1 = arith.constant 0 : i32
    return %c0_i32, %c0_i32_0 : i32, i32
  }
  func.func @transform_2(%arg0: i32, %arg1: i32) -> (i32, i32) {
    %c0_i32 = arith.constant 0 : i32
    %c0_i32_0 = arith.constant 0 : i32
    %c0_i32_1 = arith.constant 0 : i32
    return %c0_i32, %c0_i32_0 : i32, i32
  }
  func.func @transform_3(%arg0: i32, %arg1: i32) -> (i32, i32) {
    %c0_i32 = arith.constant 0 : i32
    %c0_i32_0 = arith.constant 0 : i32
    %c0_i32_1 = arith.constant 0 : i32
    return %c0_i32, %c0_i32_0 : i32, i32
  }
  func.func @transform_4(%arg0: i32, %arg1: i32) -> (i32, i32) {
    %c0_i32 = arith.constant 0 : i32
    %c0_i32_0 = arith.constant 0 : i32
    %c0_i32_1 = arith.constant 0 : i32
    return %c0_i32, %c0_i32_0 : i32, i32
  }
  func.func @transform_5(%arg0: i32, %arg1: i32) -> (i32, i32) {
    %c0_i32 = arith.constant 0 : i32
    %c0_i32_0 = arith.constant 0 : i32
    %c0_i32_1 = arith.constant 0 : i32
    return %c0_i32, %c0_i32_0 : i32, i32
  }
  func.func @transform_6(%arg0: i32, %arg1: i32) -> (i32, i32) {
    %c0_i32 = arith.constant 0 : i32
    %c0_i32_0 = arith.constant 0 : i32
    %c0_i32_1 = arith.constant 0 : i32
    return %c0_i32, %c0_i32_0 : i32, i32
  }
  func.func @transform_7(%arg0: i32, %arg1: i32) -> (i32, i32) {
    %c0_i32 = arith.constant 0 : i32
    %c0_i32_0 = arith.constant 0 : i32
    %c0_i32_1 = arith.constant 0 : i32
    return %c0_i32, %c0_i32_0 : i32, i32
  }
  func.func @transform_8(%arg0: i32, %arg1: i32) -> (i32, i32, i32) {
    %c0_i32 = arith.constant 0 : i32
    %c0_i32_0 = arith.constant 0 : i32
    %c0_i32_1 = arith.constant 0 : i32
    return %arg0, %c0_i32, %c0_i32_0 : i32, i32, i32
  }
  func.func @transform_9(%arg0: i32, %arg1: i32) -> (i32, i32, i32) {
    %c0_i32 = arith.constant 0 : i32
    %c0_i32_0 = arith.constant 0 : i32
    return %arg0, %c0_i32, %arg1 : i32, i32, i32
  }
}

</mosaic_0001>

<llo_original>
// kernel: tpu_custom_call.1
$region0: #{tpu_custom_call.1}
  #allocation0 [shape = 'u32[]', space=smem, size = 0x4, offset = 0x4, fixed_abs, tag = 'smem constant byte address 0x4 - core index']
  #allocation1 [shape = 'u32[144,128]{1,0:T(1,128)}', space=vmem, size = 0x12000, scoped, tag = 'internal scratch']
  %s0 = inlined_call_operand.vmem [shape: bf16[2,36,256], index: 0, kind: input, shape index: {}]
  %s1 = inlined_call_operand.vmem [shape: bf16[9,36], index: 1, kind: input, shape index: {}]
  %s2 = inlined_call_operand.vmem [shape: f32[9,1], index: 2, kind: input, shape index: {}]
  %s3 = inlined_call_operand.vmem [shape: bf16[9,9], index: 3, kind: input, shape index: {}]
  %s4 = inlined_call_operand.vmem [shape: f32[9,1], index: 4, kind: input, shape index: {}]
  %s5 = inlined_call_operand.vmem [shape: bf16[9,9], index: 5, kind: input, shape index: {}]
  %s6 = inlined_call_operand.vmem [shape: f32[9,1], index: 6, kind: input, shape index: {}]
  %s7 = inlined_call_operand.vmem [shape: bf16[8,36], index: 7, kind: input, shape index: {}]
  %s8 = inlined_call_operand.vmem [shape: f32[2,8,1], index: 8, kind: input, shape index: {}]
  %s9 = inlined_call_operand.hbm [shape: f32[2,8,256], index: 9, kind: output, shape index: {}]
  %s10 = sld [smem:[#allocation0]]
  $region110: #{tpu_custom_call.1} parent=0
    _
  %s12 = ssub.s32 1, %s10
  %s13 = scalar_select 0, %s12, %s10
  $region1: #{tpu_custom_call.1} parent=0
    #allocation2 [shape = 'u8[20480]{0}', space=vmem, size = 0x5000, scoped, tag = 'input window, operand 0']
    #allocation3 [shape = 'u8[8192]{0}', space=vmem, size = 0x2000, scoped, tag = 'output window, operand 0']
    #allocation4 [shape = 's32[2]{0}', space=sflag, size = 0x8, scoped, tag = 'scoped memory for tpu_custom_call.1']
    %14 = vsyncpa [#allocation4], 0
    %s15 = scalar_lea.sflag [#allocation4], 1
    %16 = vsyncpa %s15, 0
    loop: start=0, step=1, limit=6
    $region2: #{tpu_custom_call.1} parent=1 // loop_pre_header
      _
    $region3: #{tpu_custom_call.1} parent=1 // loop_header
      %s18 = sphi 0, %s22
      %p19 = scmp.ge.s32.totalorder %s18, 6
      %s25 = sphi 0, %s37
      %s26 = sphi 0, %s33
      %s27 = sphi 0, %s25
      %s28 = sphi 0, %s26
      %s29 = sphi 0, %s27
      %s30 = sphi 0, %s28
      %s42 = sphi 0, %s44
      %s45 = sphi 0, %s42
      %s46 = sphi 0, %s45
      %s62 = sphi 0, %s46
      %s66 = sphi 0, %s66
      %s68 = sphi 0, %s66
      %s69 = sphi 0, %s68
      %s83 = sphi 0, %s69
      %s87 = sphi 0, %s87
      %s89 = sphi 0, %s87
      %s90 = sphi 0, %s89
      %s104 = sphi 0, %s90
      %s108 = sphi 0, %s108
      %s110 = sphi 0, %s108
      %s111 = sphi 0, %s110
      %s125 = sphi 0, %s111
      %s129 = sphi 0, %s129
      %s131 = sphi 0, %s129
      %s132 = sphi 0, %s131
      %s146 = sphi 0, %s132
      %s150 = sphi 0, %s150
      %s152 = sphi 0, %s150
      %s153 = sphi 0, %s152
      %s167 = sphi 0, %s153
      %s171 = sphi 0, %s171
      %s173 = sphi 0, %s171
      %s174 = sphi 0, %s173
      %s188 = sphi 0, %s174
      %s192 = sphi 0, %s192
      %s194 = sphi 0, %s192
      %s195 = sphi 0, %s194
      %s209 = sphi 0, %s195
      %s215 = sphi 0, %s217
      %s218 = sphi 0, %s215
      %s219 = sphi 0, %s218
      %s235 = sphi 0, %s219
      %s243 = sphi 0, %s245
      %s246 = sphi 0, %s243
      %s247 = sphi 0, %s246
      %s263 = sphi 0, %s247
    $region4: #{tpu_custom_call.1} parent=1 // loop_header_branch
      %21 = sbr.rel (%p19) target = $region8
    $region5: #{tpu_custom_call.1} parent=1 // loop_body
      %s23 = ssub.s32 %s18, 1
      %s24 = ssub.s32 %s18, 2
      %s31 = sadd.s32 1, %s26
      %p32 = scmp.ge.s32.totalorder %s31, 2
      %s33 = scalar_select %p32, 0, %s31
      %s34 = sadd.s32 1, %s25
      %s35 = scalar_select %p32, %s34, %s25
      %p36 = scmp.ge.s32.totalorder %s35, 2
      %s37 = scalar_select %p36, 0, %s35
      %s38 = ssub.s32 %s25, %s37
      %s39 = ssub.s32 %s26, %s33
      %s40 = sor.u32 %s38, %s39
      %p41 = scmp.eq.s32.totalorder %s40, 0
      %s43 = sadd.s32 %s42, 1
      %s44 = scalar_select %p41, %s42, %s43
      %p47 = pneg %p41
      %p48 = scmp.eq.s32.totalorder %s18, 3
      %p49 = por %p47, %p48
      %p50 = scmp.ne.s32.totalorder %s42, %s45
      %p51 = scmp.eq.s32.totalorder %s18, 0
      %p52 = por %p50, %p51
      %p53 = scmp.ne.s32.totalorder %s42, %s45
      %p54 = scmp.eq.s32.totalorder %s23, 3
      %p55 = por %p53, %p54
      %p56 = scmp.ne.s32.totalorder %s45, %s46
      %p57 = scmp.eq.s32.totalorder %s23, 0
      %p58 = por %p56, %p57
      %p59 = scmp.ne.s32.totalorder %s45, %s46
      %p60 = scmp.eq.s32.totalorder %s24, 3
      %p61 = por %p59, %p60
      %p63 = scmp.ne.s32.totalorder %s46, %s62
      %p64 = scmp.eq.s32.totalorder %s24, 0
      %p65 = por %p63, %p64
      %s67 = sadd.s32 %s66, 1
      %p70 = scmp.eq.s32.totalorder %s18, 3
      %p71 = scmp.ne.s32.totalorder %s66, %s68
      %p72 = scmp.eq.s32.totalorder %s18, 0
      %p73 = por %p71, %p72
      %p74 = scmp.ne.s32.totalorder %s66, %s68
      %p75 = scmp.eq.s32.totalorder %s23, 3
      %p76 = por %p74, %p75
      %p77 = scmp.ne.s32.totalorder %s68, %s69
      %p78 = scmp.eq.s32.totalorder %s23, 0
      %p79 = por %p77, %p78
      %p80 = scmp.ne.s32.totalorder %s68, %s69
      %p81 = scmp.eq.s32.totalorder %s24, 3
      %p82 = por %p80, %p81
      %p84 = scmp.ne.s32.totalorder %s69, %s83
      %p85 = scmp.eq.s32.totalorder %s24, 0
      %p86 = por %p84, %p85
      %s88 = sadd.s32 %s87, 1
      %p91 = scmp.eq.s32.totalorder %s18, 3
      %p92 = scmp.ne.s32.totalorder %s87, %s89
      %p93 = scmp.eq.s32.totalorder %s18, 0
      %p94 = por %p92, %p93
      %p95 = scmp.ne.s32.totalorder %s87, %s89
      %p96 = scmp.eq.s32.totalorder %s23, 3
      %p97 = por %p95, %p96
      %p98 = scmp.ne.s32.totalorder %s89, %s90
      %p99 = scmp.eq.s32.totalorder %s23, 0
      %p100 = por %p98, %p99
      %p101 = scmp.ne.s32.totalorder %s89, %s90
      %p102 = scmp.eq.s32.totalorder %s24, 3
      %p103 = por %p101, %p102
      %p105 = scmp.ne.s32.totalorder %s90, %s104
      %p106 = scmp.eq.s32.totalorder %s24, 0
      %p107 = por %p105, %p106
      %s109 = sadd.s32 %s108, 1
      %p112 = scmp.eq.s32.totalorder %s18, 3
      %p113 = scmp.ne.s32.totalorder %s108, %s110
      %p114 = scmp.eq.s32.totalorder %s18, 0
      %p115 = por %p113, %p114
      %p116 = scmp.ne.s32.totalorder %s108, %s110
      %p117 = scmp.eq.s32.totalorder %s23, 3
      %p118 = por %p116, %p117
      %p119 = scmp.ne.s32.totalorder %s110, %s111
      %p120 = scmp.eq.s32.totalorder %s23, 0
      %p121 = por %p119, %p120
      %p122 = scmp.ne.s32.totalorder %s110, %s111
      %p123 = scmp.eq.s32.totalorder %s24, 3
      %p124 = por %p122, %p123
      %p126 = scmp.ne.s32.totalorder %s111, %s125
      %p127 = scmp.eq.s32.totalorder %s24, 0
      %p128 = por %p126, %p127
      %s130 = sadd.s32 %s129, 1
      %p133 = scmp.eq.s32.totalorder %s18, 3
      %p134 = scmp.ne.s32.totalorder %s129, %s131
      %p135 = scmp.eq.s32.totalorder %s18, 0
      %p136 = por %p134, %p135
      %p137 = scmp.ne.s32.totalorder %s129, %s131
      %p138 = scmp.eq.s32.totalorder %s23, 3
      %p139 = por %p137, %p138
      %p140 = scmp.ne.s32.totalorder %s131, %s132
      %p141 = scmp.eq.s32.totalorder %s23, 0
      %p142 = por %p140, %p141
      %p143 = scmp.ne.s32.totalorder %s131, %s132
      %p144 = scmp.eq.s32.totalorder %s24, 3
      %p145 = por %p143, %p144
      %p147 = scmp.ne.s32.totalorder %s132, %s146
      %p148 = scmp.eq.s32.totalorder %s24, 0
      %p149 = por %p147, %p148
      %s151 = sadd.s32 %s150, 1
      %p154 = scmp.eq.s32.totalorder %s18, 3
      %p155 = scmp.ne.s32.totalorder %s150, %s152
      %p156 = scmp.eq.s32.totalorder %s18, 0
      %p157 = por %p155, %p156
      %p158 = scmp.ne.s32.totalorder %s150, %s152
      %p159 = scmp.eq.s32.totalorder %s23, 3
      %p160 = por %p158, %p159
      %p161 = scmp.ne.s32.totalorder %s152, %s153
      %p162 = scmp.eq.s32.totalorder %s23, 0
      %p163 = por %p161, %p162
      %p164 = scmp.ne.s32.totalorder %s152, %s153
      %p165 = scmp.eq.s32.totalorder %s24, 3
      %p166 = por %p164, %p165
      %p168 = scmp.ne.s32.totalorder %s153, %s167
      %p169 = scmp.eq.s32.totalorder %s24, 0
      %p170 = por %p168, %p169
      %s172 = sadd.s32 %s171, 1
      %p175 = scmp.eq.s32.totalorder %s18, 3
      %p176 = scmp.ne.s32.totalorder %s171, %s173
      %p177 = scmp.eq.s32.totalorder %s18, 0
      %p178 = por %p176, %p177
      %p179 = scmp.ne.s32.totalorder %s171, %s173
      %p180 = scmp.eq.s32.totalorder %s23, 3
      %p181 = por %p179, %p180
      %p182 = scmp.ne.s32.totalorder %s173, %s174
      %p183 = scmp.eq.s32.totalorder %s23, 0
      %p184 = por %p182, %p183
      %p185 = scmp.ne.s32.totalorder %s173, %s174
      %p186 = scmp.eq.s32.totalorder %s24, 3
      %p187 = por %p185, %p186
      %p189 = scmp.ne.s32.totalorder %s174, %s188
      %p190 = scmp.eq.s32.totalorder %s24, 0
      %p191 = por %p189, %p190
      %s193 = sadd.s32 %s192, 1
      %p196 = scmp.eq.s32.totalorder %s18, 3
      %p197 = scmp.ne.s32.totalorder %s192, %s194
      %p198 = scmp.eq.s32.totalorder %s18, 0
      %p199 = por %p197, %p198
      %p200 = scmp.ne.s32.totalorder %s192, %s194
      %p201 = scmp.eq.s32.totalorder %s23, 3
      %p202 = por %p200, %p201
      %p203 = scmp.ne.s32.totalorder %s194, %s195
      %p204 = scmp.eq.s32.totalorder %s23, 0
      %p205 = por %p203, %p204
      %p206 = scmp.ne.s32.totalorder %s194, %s195
      %p207 = scmp.eq.s32.totalorder %s24, 3
      %p208 = por %p206, %p207
      %p210 = scmp.ne.s32.totalorder %s195, %s209
      %p211 = scmp.eq.s32.totalorder %s24, 0
      %p212 = por %p210, %p211
      %s213 = ssub.s32 %s25, %s37
      %p214 = scmp.eq.s32.totalorder %s213, 0
      %s216 = sadd.s32 %s215, 1
      %s217 = scalar_select %p214, %s215, %s216
      %p220 = pneg %p214
      %p221 = scmp.eq.s32.totalorder %s18, 3
      %p222 = por %p220, %p221
      %p223 = scmp.ne.s32.totalorder %s215, %s218
      %p224 = scmp.eq.s32.totalorder %s18, 0
      %p225 = por %p223, %p224
      %p226 = scmp.ne.s32.totalorder %s215, %s218
      %p227 = scmp.eq.s32.totalorder %s23, 3
      %p228 = por %p226, %p227
      %p229 = scmp.ne.s32.totalorder %s218, %s219
      %p230 = scmp.eq.s32.totalorder %s23, 0
      %p231 = por %p229, %p230
      %p232 = scmp.ne.s32.totalorder %s218, %s219
      %p233 = scmp.eq.s32.totalorder %s24, 3
      %p234 = por %p232, %p233
      %p236 = scmp.ne.s32.totalorder %s219, %s235
      %p237 = scmp.eq.s32.totalorder %s24, 0
      %p238 = por %p236, %p237
      %s239 = ssub.s32 %s25, %s37
      %s240 = ssub.s32 %s26, %s33
      %s241 = sor.u32 %s239, %s240
      %p242 = scmp.eq.s32.totalorder %s241, 0
      %s244 = sadd.s32 %s243, 1
      %s245 = scalar_select %p242, %s243, %s244
      %p248 = pneg %p242
      %p249 = scmp.eq.s32.totalorder %s18, 3
      %p250 = por %p248, %p249
      %p251 = scmp.ne.s32.totalorder %s243, %s246
      %p252 = scmp.eq.s32.totalorder %s18, 0
      %p253 = por %p251, %p252
      %p254 = scmp.ne.s32.totalorder %s243, %s246
      %p255 = scmp.eq.s32.totalorder %s23, 3
      %p256 = por %p254, %p255
      %p257 = scmp.ne.s32.totalorder %s246, %s247
      %p258 = scmp.eq.s32.totalorder %s23, 0
      %p259 = por %p257, %p258
      %p260 = scmp.ne.s32.totalorder %s246, %s247
      %p261 = scmp.eq.s32.totalorder %s24, 3
      %p262 = por %p260, %p261
      %p264 = scmp.ne.s32.totalorder %s247, %s263
      %p265 = scmp.eq.s32.totalorder %s24, 0
      %p266 = por %p264, %p265
      %p267 = scmp.le.s32.totalorder 1, %s18
      %p268 = scmp.lt.s32.totalorder %s18, 5
      %p269 = pnand %p267, %p268
      %p270 = pneg %p269
      // Predicated region
      $region9: #{tpu_custom_call.1} parent=5 // pred_check
        _
      $region10: #{tpu_custom_call.1} parent=5 // pred_check_branch
        %272 = sbr.rel (%p269) target = $region12
      $region11: #{tpu_custom_call.1} parent=5 // pred_region
        %s273 = ssub.s32 %s18, 1
        // Predicated region
        $region13: #{tpu_custom_call.1} parent=11 // pred_check
          %p274 = pneg %p79
        $region14: #{tpu_custom_call.1} parent=11 // pred_check_branch
          %276 = sbr.rel (%p274) target = $region16
        $region15: #{tpu_custom_call.1} parent=11 // pred_region
          _
        $region16: #{tpu_custom_call.1} parent=11 // pred_fallthru
          _
        // Predicated region
        $region17: #{tpu_custom_call.1} parent=11 // pred_check
          %p277 = pneg %p100
        $region18: #{tpu_custom_call.1} parent=11 // pred_check_branch
          %279 = sbr.rel (%p277) target = $region20
        $region19: #{tpu_custom_call.1} parent=11 // pred_region
          _
        $region20: #{tpu_custom_call.1} parent=11 // pred_fallthru
          _
        // Predicated region
        $region21: #{tpu_custom_call.1} parent=11 // pred_check
          %p280 = pneg %p121
        $region22: #{tpu_custom_call.1} parent=11 // pred_check_branch
          %282 = sbr.rel (%p280) target = $region24
        $region23: #{tpu_custom_call.1} parent=11 // pred_region
          _
        $region24: #{tpu_custom_call.1} parent=11 // pred_fallthru
          _
        // Predicated region
        $region25: #{tpu_custom_call.1} parent=11 // pred_check
          %p283 = pneg %p142
        $region26: #{tpu_custom_call.1} parent=11 // pred_check_branch
          %285 = sbr.rel (%p283) target = $region28
        $region27: #{tpu_custom_call.1} parent=11 // pred_region
          _
        $region28: #{tpu_custom_call.1} parent=11 // pred_fallthru
          _
        // Predicated region
        $region29: #{tpu_custom_call.1} parent=11 // pred_check
          %p286 = pneg %p163
        $region30: #{tpu_custom_call.1} parent=11 // pred_check_branch
          %288 = sbr.rel (%p286) target = $region32
        $region31: #{tpu_custom_call.1} parent=11 // pred_region
          _
        $region32: #{tpu_custom_call.1} parent=11 // pred_fallthru
          _
        // Predicated region
        $region33: #{tpu_custom_call.1} parent=11 // pred_check
          %p289 = pneg %p184
        $region34: #{tpu_custom_call.1} parent=11 // pred_check_branch
          %291 = sbr.rel (%p289) target = $region36
        $region35: #{tpu_custom_call.1} parent=11 // pred_region
          _
        $region36: #{tpu_custom_call.1} parent=11 // pred_fallthru
          _
        // Predicated region
        $region37: #{tpu_custom_call.1} parent=11 // pred_check
          %p292 = pneg %p205
        $region38: #{tpu_custom_call.1} parent=11 // pred_check_branch
          %294 = sbr.rel (%p292) target = $region40
        $region39: #{tpu_custom_call.1} parent=11 // pred_region
          _
        $region40: #{tpu_custom_call.1} parent=11 // pred_fallthru
          _
      $region12: #{tpu_custom_call.1} parent=5 // pred_fallthru
        _
      %p295 = scmp.lt.s32.totalorder %s18, 4
      // Predicated region
      $region41: #{tpu_custom_call.1} parent=5 // pred_check
        %p296 = pneg %p295
      $region42: #{tpu_custom_call.1} parent=5 // pred_check_branch
        %298 = sbr.rel (%p296) target = $region44
      $region43: #{tpu_custom_call.1} parent=5 // pred_region
        // Predicated region
        $region45: #{tpu_custom_call.1} parent=43 // pred_check
          %p299 = pneg %p52
        $region46: #{tpu_custom_call.1} parent=43 // pred_check_branch
          %301 = sbr.rel (%p299) target = $region48
        $region47: #{tpu_custom_call.1} parent=43 // pred_region
          %s302 = sand.u32 %s42, 1
          %s303 = sand.u32 %s42, 1
          %s304 = smul.addr %s303, 20
          %s305 = scalar_lea.vmem [#allocation2], %s304
          %s306 = smul.addr %s25, 10
          %s307 = sadd.s32 %s26, %s306
          %s308 = smul.addr %s307, 4
          %s309 = scalar_lea.vmem %s0, %s308
          // Predicated region
          $region49: #{tpu_custom_call.1} parent=47 // pred_check
            _
          $region50: #{tpu_custom_call.1} parent=47 // pred_check_branch
            %311 = sbr.rel (0) target = $region52
          $region51: #{tpu_custom_call.1} parent=47 // pred_region
            // Predicated region
            $region53: #{tpu_custom_call.1} parent=51 // pred_check
              _
            $region54: #{tpu_custom_call.1} parent=51 // pred_check_branch
              %313 = sbr.rel target = $region56
            $region55: #{tpu_custom_call.1} parent=51 // pred_region
              // Predicated region
              $region68: #{tpu_custom_call.1} parent=55 // pred_check
                _
              $region69: #{tpu_custom_call.1} parent=55 // pred_check_branch
                %336 = sbr.rel (0) target = $region71
              $region70: #{tpu_custom_call.1} parent=55 // pred_region
                loop: start=0, step=1, limit=1
                $region72: #{tpu_custom_call.1} parent=70 // loop_pre_header
                  _
                $region73: #{tpu_custom_call.1} parent=70 // loop_header
                  %s338 = sphi 0, %s342
                  %p339 = scmp.ge.s32.totalorder %s338, 1
                  %s343 = sphi %s309, %s309
                  %s344 = sphi %s305, %s305
                $region74: #{tpu_custom_call.1} parent=70 // loop_header_branch
                  %341 = sbr.rel (%p339) target = $region78
                $region75: #{tpu_custom_call.1} parent=70 // loop_body
                  _
                $region76: #{tpu_custom_call.1} parent=70 // loop_footer
                  %s342 = sadd.s32 1, %s338
                $region77: #{tpu_custom_call.1} parent=70 // loop_footer_branch
                  %337 = sbr.rel target = $region73
                $region78: #{tpu_custom_call.1} parent=70 // loop_exit
                  _
                loop: start=0, step=1, limit=1
                $region79: #{tpu_custom_call.1} parent=70 // loop_pre_header
                  _
                $region80: #{tpu_custom_call.1} parent=70 // loop_header
                  %s347 = sphi 0, %s351
                  %p348 = scmp.ge.s32.totalorder %s347, 1
                  %s352 = sphi %s309, %s309
                  %s353 = sphi %s305, %s305
                $region81: #{tpu_custom_call.1} parent=70 // loop_header_branch
                  %350 = sbr.rel (%p348) target = $region85
                $region82: #{tpu_custom_call.1} parent=70 // loop_body
                  %v354 = vld [vmem:[%s352] sm:$0xf]
                  %355 = vst [vmem:[%s353] sm:$0xf] %v354
                  %v356 = vld [vmem:[%s352 + $0x8] sm:$0xf]
                  %357 = vst [vmem:[%s353 + $0x4] sm:$0xf] %v356
                  %v358 = vld [vmem:[%s352 + $0x10] sm:$0xf]
                  %359 = vst [vmem:[%s353 + $0x8] sm:$0xf] %v358
                  %v360 = vld [vmem:[%s352 + $0x18] sm:$0xf]
                  %361 = vst [vmem:[%s353 + $0xc] sm:$0xf] %v360
                  %v362 = vld [vmem:[%s352 + $0x20] sm:$0xf]
                  %363 = vst [vmem:[%s353 + $0x10] sm:$0xf] %v362
                $region83: #{tpu_custom_call.1} parent=70 // loop_footer
                  %s351 = sadd.s32 1, %s347
                $region84: #{tpu_custom_call.1} parent=70 // loop_footer_branch
                  %346 = sbr.rel target = $region80
                $region85: #{tpu_custom_call.1} parent=70 // loop_exit
                  _
              $region71: #{tpu_custom_call.1} parent=55 // pred_fallthru
                _
            $region56: #{tpu_custom_call.1} parent=51 // pred_fallthru
              _
            // Predicated region
            $region57: #{tpu_custom_call.1} parent=51 // pred_check
              _
            $region58: #{tpu_custom_call.1} parent=51 // pred_check_branch
              %315 = sbr.rel (0) target = $region60
            $region59: #{tpu_custom_call.1} parent=51 // pred_region
              loop: start=0, step=1, limit=1
              $region61: #{tpu_custom_call.1} parent=59 // loop_pre_header
                _
              $region62: #{tpu_custom_call.1} parent=59 // loop_header
                %s318 = sphi 0, %s322
                %p319 = scmp.ge.s32.totalorder %s318, 1
                %s323 = sphi %s309, %s309
                %s324 = sphi %s305, %s305
              $region63: #{tpu_custom_call.1} parent=59 // loop_header_branch
                %321 = sbr.rel (%p319) target = $region67
              $region64: #{tpu_custom_call.1} parent=59 // loop_body
                %v325 = vld [vmem:[%s323] sm:$0xf]
                %326 = vst [vmem:[%s324] sm:$0xf] %v325
                %v327 = vld [vmem:[%s323 + $0x8] sm:$0xf]
                %328 = vst [vmem:[%s324 + $0x4] sm:$0xf] %v327
                %v329 = vld [vmem:[%s323 + $0x10] sm:$0xf]
                %330 = vst [vmem:[%s324 + $0x8] sm:$0xf] %v329
                %v331 = vld [vmem:[%s323 + $0x18] sm:$0xf]
                %332 = vst [vmem:[%s324 + $0xc] sm:$0xf] %v331
                %v333 = vld [vmem:[%s323 + $0x20] sm:$0xf]
                %334 = vst [vmem:[%s324 + $0x10] sm:$0xf] %v333
              $region65: #{tpu_custom_call.1} parent=59 // loop_footer
                %s322 = sadd.s32 1, %s318
              $region66: #{tpu_custom_call.1} parent=59 // loop_footer_branch
                %317 = sbr.rel target = $region62
              $region67: #{tpu_custom_call.1} parent=59 // loop_exit
                _
            $region60: #{tpu_custom_call.1} parent=51 // pred_fallthru
              _
          $region52: #{tpu_custom_call.1} parent=47 // pred_fallthru
            _
          %364 = vnop
        $region48: #{tpu_custom_call.1} parent=43 // pred_fallthru
          _
        // Predicated region
        $region86: #{tpu_custom_call.1} parent=43 // pred_check
          %p365 = pneg %p225
        $region87: #{tpu_custom_call.1} parent=43 // pred_check_branch
          %367 = sbr.rel (%p365) target = $region89
        $region88: #{tpu_custom_call.1} parent=43 // pred_region
          %p368 = scmp.lt.s32.totalorder %s25, 1
          %s369 = scalar_select %p368, %s25, 1
          %s370 = smul.addr %s369, 8
          %s371 = scalar_lea.vmem %s8, %s370
        $region89: #{tpu_custom_call.1} parent=43 // pred_fallthru
          _
      $region44: #{tpu_custom_call.1} parent=5 // pred_fallthru
        _
      %p372 = scmp.le.s32.totalorder 1, %s18
      %p373 = scmp.lt.s32.totalorder %s18, 5
      %p374 = pnand %p372, %p373
      %p375 = pneg %p374
      // Predicated region
      $region90: #{tpu_custom_call.1} parent=5 // pred_check
        _
      $region91: #{tpu_custom_call.1} parent=5 // pred_check_branch
        %377 = sbr.rel (%p374) target = $region93
      $region92: #{tpu_custom_call.1} parent=5 // pred_region
        %s378 = ssub.s32 %s18, 1
        %s379 = sand.u32 %s45, 1
        %s380 = sand.u32 %s45, 1
        %s381 = smul.addr %s380, 20
        %s382 = scalar_lea.vmem [#allocation2], %s381
        // Predicated region
        $region94: #{tpu_custom_call.1} parent=92 // pred_check
          %p383 = pneg %p58
        $region95: #{tpu_custom_call.1} parent=92 // pred_check_branch
          %385 = sbr.rel (%p383) target = $region97
        $region96: #{tpu_custom_call.1} parent=92 // pred_region
          _
        $region97: #{tpu_custom_call.1} parent=92 // pred_fallthru
          _
        %s386 = sand.u32 %s45, 1
        %s387 = sand.u32 %s45, 1
        %s388 = smul.addr %s387, 20
        %s389 = scalar_lea.vmem [#allocation2], %s388
        %p390 = pneg %p58
        %p391 = pneg %p55
        %p392 = pneg %p79
        %p393 = pneg %p76
        %p394 = pneg %p100
        %p395 = pneg %p97
        %p396 = pneg %p121
        %p397 = pneg %p118
        %p398 = pneg %p142
        %p399 = pneg %p139
        %p400 = pneg %p163
        %p401 = pneg %p160
        %p402 = pneg %p184
        %p403 = pneg %p181
        %p404 = pneg %p205
        %p405 = pneg %p202
        %p406 = scmp.lt.s32.totalorder %s27, 1
        %s407 = scalar_select %p406, %s27, 1
        %s408 = smul.addr %s407, 8
        %s409 = scalar_lea.vmem %s8, %s408
        %p410 = pneg %p231
        %p411 = pneg %p228
        %p412 = pneg %p259
        %p413 = pneg %p256
        %s414 = sand.u32 %s246, 1
        %s415 = scalar_lea.sflag [#allocation4], %s414
        %s416 = sand.u32 %s246, 1
        %s417 = smul.addr %s416, 8
        %s418 = scalar_lea.vmem [#allocation3], %s417
        %p419 = scmp.lt.s32.totalorder %s27, 1
        %s420 = scalar_select %p419, %s27, 1
        %s421 = smul.addr %s420, 8
        %s422 = scalar_lea.vmem %s8, %s421
        %v424 = vld [vmem:[%s382] sm:$0xf]
        %v425 = vld [vmem:[%s382 + $0x4] sm:$0xf]
        %v426 = vld [vmem:[%s382 + $0x8] sm:$0xf]
        %v427 = vld [vmem:[%s382 + $0xc] sm:$0xf]
        %v428 = vld [vmem:[%s382 + $0x10] sm:$0x3]
        %v429 = vld [vmem:[%s1] sm:$0xf]
        %v430 = vld [vmem:[%s1 + $0x4] sm:$0x1]
        %v431 = vld [vmem:[%s2] sm:$0xff]
        %v432 = vld [vmem:[%s2 + $0x8] sm:$0x1]
        %434 = vset.pattern.permute.xlu0 0
        %435 = vperm.xlu0 %434, %v431
        %v436 = vpop.permute.xlu0 %435
        %439 = vset.pattern.permute.xlu0 0
        %440 = vperm.xlu0 %439, %v432
        %v441 = vpop.permute.xlu0 %440
        %v445 = vunpack.c.l.b16 %v429
        %v446 = vunpack.c.l.b16 %v430
        %v447 = vpack.c.b16 %v446, %v445
        %v453 = vunpack.c.l.b16 %v424
        %v454 = vunpack.c.l.b16 %v425
        %v455 = vunpack.c.l.b16 %v426
        %v456 = vunpack.c.l.b16 %v427
        %v457 = vunpack.c.l.b16 %v428
        %v458 = vpack.c.b16 %v454, %v453
        %v459 = vpack.c.b16 %v456, %v455
        %v460 = vpack.c.b16 %v457, %v457
        %vm463 = vcmask 293888
        %v465 = vsel %vm463, %v447, 0
        %vm467 = vcmask 1041408
        %v469 = vsel %vm467, %v460, 0
        %471 = vmatprep.subr.bf16.mxu0 0
        %472 = vmatpush1.bf16.msra.mxu0 %v458
        %473 = vmatprep.subr.bf16.mxu0 0
        %474 = vmatpush1.bf16.msra.mxu0 %v459
        %475 = vmatprep.subr.bf16.mxu0 0
        %476 = vmatpush1.bf16.msra.mxu0 %v469
        %477 = vmatprep.subr.bf16.mxu0 0
        %478 = vmatpush1.bf16.msra.mxu0 0
        %479 = vmatprep.subr.bf16.mxu0 0
        %480 = vmatpush1.bf16.msra.mxu0 0
        %481 = vmatprep.subr.bf16.mxu0 0
        %482 = vmatpush1.bf16.msra.mxu0 0
        %483 = vmatprep.subr.bf16.mxu0 0
        %484 = vmatpush1.bf16.msra.mxu0 0
        %485 = vmatprep.subr.bf16.mxu0 0
        %486 = vmatpush1.bf16.msra.mxu0 0
        %487 = vmatprep.subr.bf16.mxu0 0
        %488 = vmatpush1.bf16.msra.mxu0 0
        %489 = vmatprep.subr.bf16.mxu0 0
        %490 = vmatpush1.bf16.msra.mxu0 0
        %491 = vmatprep.subr.bf16.mxu0 0
        %492 = vmatpush1.bf16.msra.mxu0 0
        %493 = vmatprep.subr.bf16.mxu0 0
        %494 = vmatpush1.bf16.msra.mxu0 0
        %495 = vmatprep.subr.bf16.mxu0 0
        %496 = vmatpush1.bf16.msra.mxu0 0
        %497 = vmatprep.subr.bf16.mxu0 0
        %498 = vmatpush1.bf16.msra.mxu0 0
        %499 = vmatprep.subr.bf16.mxu0 0
        %500 = vmatpush1.bf16.msra.mxu0 0
        %501 = vmatprep.subr.bf16.mxu0 0
        %502 = vmatpush1.bf16.msra.mxu0 0
        %503 = vmatprep.mubr.bf16.mxu0 0
        %504 = vmatmul.mubr.bf16.gmra.mrb[0].mxu0 %v465
        %v505 = vpop.f32.mrb[0].mxu0
        %v506 = vadd.f32 %v436, %v505
        %v507 = vpop.f32.mrb[0].mxu0
        %v508 = vpop.f32.mrb[0].mxu0
        %v509 = vadd.f32 %v441, %v508
        %v510 = vpop.f32.mrb[0].mxu0
        %511 = vdwg.mxu0
        %v512 = vmax.f32 %v506, 0.0
        %v513 = vmax.f32 %v509, 0.0
        %v514 = vld [vmem:[%s3] sm:$0xf]
        %v515 = vld [vmem:[%s3 + $0x4] sm:$0x1]
        %v516 = vpack.c.bf16 %v513, %v512
        %v517 = vld [vmem:[%s4] sm:$0xff]
        %v518 = vld [vmem:[%s4 + $0x8] sm:$0x1]
        %520 = vset.pattern.permute.xlu0 0
        %521 = vperm.xlu0 %520, %v517
        %v522 = vpop.permute.xlu0 %521
        %525 = vset.pattern.permute.xlu0 0
        %526 = vperm.xlu0 %525, %v518
        %v527 = vpop.permute.xlu0 %526
        %v531 = vunpack.c.l.b16 %v514
        %v532 = vunpack.c.l.b16 %v515
        %v533 = vpack.c.b16 %v532, %v531
        %vm534 = vcmask 72704
        %v536 = vsel %vm534, %v533, 0
        %vm538 = vcmask 1043456
        %vm539 = vcmask 1044480
        %v540 = vsel %vm538, 4294967295, 65535
        %v541 = vsel %vm539, %v540, 0
        %v543 = vand.u32 %v516, %v541
        %545 = vmatprep.subr.bf16.mxu0 0
        %546 = vmatpush1.bf16.msra.mxu0 %v543
        %547 = vmatprep.subr.bf16.mxu0 0
        %548 = vmatpush1.bf16.msra.mxu0 0
        %549 = vmatprep.subr.bf16.mxu0 0
        %550 = vmatpush1.bf16.msra.mxu0 0
        %551 = vmatprep.subr.bf16.mxu0 0
        %552 = vmatpush1.bf16.msra.mxu0 0
        %553 = vmatprep.subr.bf16.mxu0 0
        %554 = vmatpush1.bf16.msra.mxu0 0
        %555 = vmatprep.subr.bf16.mxu0 0
        %556 = vmatpush1.bf16.msra.mxu0 0
        %557 = vmatprep.subr.bf16.mxu0 0
        %558 = vmatpush1.bf16.msra.mxu0 0
        %559 = vmatprep.subr.bf16.mxu0 0
        %560 = vmatpush1.bf16.msra.mxu0 0
        %561 = vmatprep.subr.bf16.mxu0 0
        %562 = vmatpush1.bf16.msra.mxu0 0
        %563 = vmatprep.subr.bf16.mxu0 0
        %564 = vmatpush1.bf16.msra.mxu0 0
        %565 = vmatprep.subr.bf16.mxu0 0
        %566 = vmatpush1.bf16.msra.mxu0 0
        %567 = vmatprep.subr.bf16.mxu0 0
        %568 = vmatpush1.bf16.msra.mxu0 0
        %569 = vmatprep.subr.bf16.mxu0 0
        %570 = vmatpush1.bf16.msra.mxu0 0
        %571 = vmatprep.subr.bf16.mxu0 0
        %572 = vmatpush1.bf16.msra.mxu0 0
        %573 = vmatprep.subr.bf16.mxu0 0
        %574 = vmatpush1.bf16.msra.mxu0 0
        %575 = vmatprep.subr.bf16.mxu0 0
        %576 = vmatpush1.bf16.msra.mxu0 0
        %577 = vmatprep.mubr.bf16.mxu0 0
        %578 = vmatmul.mubr.bf16.gmra.mrb[0].mxu0 %v536
        %v579 = vpop.f32.mrb[0].mxu0
        %v580 = vadd.f32 %v522, %v579
        %v581 = vpop.f32.mrb[0].mxu0
        %v582 = vpop.f32.mrb[0].mxu0
        %v583 = vadd.f32 %v527, %v582
        %v584 = vpop.f32.mrb[0].mxu0
        %585 = vdwg.mxu0
        %v586 = vmax.f32 %v580, 0.0
        %v587 = vmax.f32 %v583, 0.0
        %v588 = vld [vmem:[%s5] sm:$0xf]
        %v589 = vld [vmem:[%s5 + $0x4] sm:$0x1]
        %v590 = vpack.c.bf16 %v587, %v586
        %v591 = vld [vmem:[%s6] sm:$0xff]
        %v592 = vld [vmem:[%s6 + $0x8] sm:$0x1]
        %594 = vset.pattern.permute.xlu0 0
        %595 = vperm.xlu0 %594, %v591
        %v596 = vpop.permute.xlu0 %595
        %599 = vset.pattern.permute.xlu0 0
        %600 = vperm.xlu0 %599, %v592
        %v601 = vpop.permute.xlu0 %600
        %v605 = vunpack.c.l.b16 %v588
        %v606 = vunpack.c.l.b16 %v589
        %v607 = vpack.c.b16 %v606, %v605
        %v609 = vsel %vm534, %v607, 0
        %v612 = vand.u32 %v590, %v541
        %614 = vmatprep.subr.bf16.mxu0 0
        %615 = vmatpush1.bf16.msra.mxu0 %v612
        %616 = vmatprep.subr.bf16.mxu0 0
        %617 = vmatpush1.bf16.msra.mxu0 0
        %618 = vmatprep.subr.bf16.mxu0 0
        %619 = vmatpush1.bf16.msra.mxu0 0
        %620 = vmatprep.subr.bf16.mxu0 0
        %621 = vmatpush1.bf16.msra.mxu0 0
        %622 = vmatprep.subr.bf16.mxu0 0
        %623 = vmatpush1.bf16.msra.mxu0 0
        %624 = vmatprep.subr.bf16.mxu0 0
        %625 = vmatpush1.bf16.msra.mxu0 0
        %626 = vmatprep.subr.bf16.mxu0 0
        %627 = vmatpush1.bf16.msra.mxu0 0
        %628 = vmatprep.subr.bf16.mxu0 0
        %629 = vmatpush1.bf16.msra.mxu0 0
        %630 = vmatprep.subr.bf16.mxu0 0
        %631 = vmatpush1.bf16.msra.mxu0 0
        %632 = vmatprep.subr.bf16.mxu0 0
        %633 = vmatpush1.bf16.msra.mxu0 0
        %634 = vmatprep.subr.bf16.mxu0 0
        %635 = vmatpush1.bf16.msra.mxu0 0
        %636 = vmatprep.subr.bf16.mxu0 0
        %637 = vmatpush1.bf16.msra.mxu0 0
        %638 = vmatprep.subr.bf16.mxu0 0
        %639 = vmatpush1.bf16.msra.mxu0 0
        %640 = vmatprep.subr.bf16.mxu0 0
        %641 = vmatpush1.bf16.msra.mxu0 0
        %642 = vmatprep.subr.bf16.mxu0 0
        %643 = vmatpush1.bf16.msra.mxu0 0
        %644 = vmatprep.subr.bf16.mxu0 0
        %645 = vmatpush1.bf16.msra.mxu0 0
        %646 = vmatprep.mubr.bf16.mxu0 0
        %647 = vmatmul.mubr.bf16.gmra.mrb[0].mxu0 %v609
        %v648 = vpop.f32.mrb[0].mxu0
        %v649 = vadd.f32 %v596, %v648
        %v650 = vpop.f32.mrb[0].mxu0
        %v651 = vpop.f32.mrb[0].mxu0
        %v652 = vadd.f32 %v601, %v651
        %v653 = vpop.f32.mrb[0].mxu0
        %654 = vdwg.mxu0
        %v655 = vxor.u32 %v649, 2147483648
        %v656 = vxor.u32 %v652, 2147483648
        %v657 = vmul.f32 %v655, 1.442695
        %v658 = vpow.pop %v657
        %v659 = vmul.f32 %v656, 1.442695
        %v660 = vpow.pop %v659
        %v661 = vadd.f32 %v658, 1.0
        %v662 = vadd.f32 %v660, 1.0
        %v663 = vrcp.pop %v661
        %v664 = vmul.f32 1.0, %v663
        %v665 = vrcp.pop %v662
        %v666 = vmul.f32 1.0, %v665
        %vm669 = vcmask 1040384
        %v670 = vrot.slane %v664, 7
        %v671 = vrot.slane %v666, 7
        %v672 = vsel %vm669, %v670, %v671
        %v675 = vrot.slane %v664, 6
        %v676 = vrot.slane %v666, 6
        %v677 = vsel %vm467, %v675, %v676
        %vm680 = vcmask 1042432
        %v681 = vrot.slane %v664, 5
        %v682 = vrot.slane %v666, 5
        %v683 = vsel %vm680, %v681, %v682
        %v686 = vsel %vm669, %v666, %v670
        %v687 = vsel %vm467, %v672, %v675
        %v688 = vsel %vm680, %v677, %v681
        %v689 = vunpack.c.l.bf16 %v424
        %v690 = vunpack.c.l.bf16 %v425
        %v691 = vunpack.c.l.bf16 %v426
        %v692 = vunpack.c.l.bf16 %v427
        %v693 = vunpack.c.l.bf16 %v428
        %v694 = vmul.f32 %v664, %v689
        %v695 = vmul.f32 %v686, %v690
        %v696 = vmul.f32 %v687, %v691
        %v697 = vmul.f32 %v688, %v692
        %v698 = vmul.f32 %v683, %v693
        %v699 = vld [vmem:[%s7] sm:$0xf]
        %v700 = vpack.c.bf16 %v695, %v694
        %v701 = vpack.c.bf16 %v697, %v696
        %v702 = vpack.c.bf16 %v698, %v698
        %v703 = vld [vmem:[%s422] sm:$0xff]
        %705 = vset.pattern.permute.xlu0 0
        %706 = vperm.xlu0 %705, %v703
        %v707 = vpop.permute.xlu0 %706
        %v710 = vsel %vm463, %v699, 0
        %v713 = vsel %vm467, %v702, 0
        %715 = vmatprep.subr.bf16.mxu0 0
        %716 = vmatpush1.bf16.msra.mxu0 %v700
        %717 = vmatprep.subr.bf16.mxu0 0
        %718 = vmatpush1.bf16.msra.mxu0 %v701
        %719 = vmatprep.subr.bf16.mxu0 0
        %720 = vmatpush1.bf16.msra.mxu0 %v713
        %721 = vmatprep.subr.bf16.mxu0 0
        %722 = vmatpush1.bf16.msra.mxu0 0
        %723 = vmatprep.subr.bf16.mxu0 0
        %724 = vmatpush1.bf16.msra.mxu0 0
        %725 = vmatprep.subr.bf16.mxu0 0
        %726 = vmatpush1.bf16.msra.mxu0 0
        %727 = vmatprep.subr.bf16.mxu0 0
        %728 = vmatpush1.bf16.msra.mxu0 0
        %729 = vmatprep.subr.bf16.mxu0 0
        %730 = vmatpush1.bf16.msra.mxu0 0
        %731 = vmatprep.subr.bf16.mxu0 0
        %732 = vmatpush1.bf16.msra.mxu0 0
        %733 = vmatprep.subr.bf16.mxu0 0
        %734 = vmatpush1.bf16.msra.mxu0 0
        %735 = vmatprep.subr.bf16.mxu0 0
        %736 = vmatpush1.bf16.msra.mxu0 0
        %737 = vmatprep.subr.bf16.mxu0 0
        %738 = vmatpush1.bf16.msra.mxu0 0
        %739 = vmatprep.subr.bf16.mxu0 0
        %740 = vmatpush1.bf16.msra.mxu0 0
        %741 = vmatprep.subr.bf16.mxu0 0
        %742 = vmatpush1.bf16.msra.mxu0 0
        %743 = vmatprep.subr.bf16.mxu0 0
        %744 = vmatpush1.bf16.msra.mxu0 0
        %745 = vmatprep.subr.bf16.mxu0 0
        %746 = vmatpush1.bf16.msra.mxu0 0
        %747 = vmatprep.mubr.bf16.mxu0 0
        %748 = vmatmul.mubr.bf16.gmra.mrb[0].mxu0 %v710
        %v749 = vpop.f32.mrb[0].mxu0
        %v750 = vadd.f32 %v707, %v749
        %v751 = vpop.f32.mrb[0].mxu0
        %v752 = vpop.f32.mrb[0].mxu0
        %v753 = vpop.f32.mrb[0].mxu0
        %754 = vdwg.mxu0
        %755 = vst [vmem:[%s418] sm:$0xff] %v750
        %s756 = sand.u32 %s246, 1
        %s757 = scalar_lea.sflag [#allocation4], %s756
        %s758 = sand.u32 %s246, 1
        %s759 = smul.addr %s758, 8
        %s760 = scalar_lea.vmem [#allocation3], %s759
        // Predicated region
        $region98: #{tpu_custom_call.1} parent=92 // pred_check
          %p761 = pneg %p256
        $region99: #{tpu_custom_call.1} parent=92 // pred_check_branch
          %763 = sbr.rel (%p761) target = $region101
        $region100: #{tpu_custom_call.1} parent=92 // pred_region
          %s765 = ssub.s32 128, 128
          %766 = vsyncadd %s757, %s765
          %s767 = smul.addr %s27, 2
          %s768 = sadd.s32 %s28, %s767
          %s769 = smul.addr %s768, 128
          %s770 = scalar_lea.hbm %s9, %s769
          %s772 = sshll.u32 %s760, 4
          %s773 = int_to_ptr.vmem [resolvable:$true] %s772
          %775 = dma.vmem_to_hbm [thread:$0]  %s773, 128, %s770, %s757
        $region101: #{tpu_custom_call.1} parent=92 // pred_fallthru
          _
      $region93: #{tpu_custom_call.1} parent=5 // pred_fallthru
        _
      %p776 = scmp.le.s32.totalorder 2, %s18
      // Predicated region
      $region102: #{tpu_custom_call.1} parent=5 // pred_check
        %p777 = pneg %p776
      $region103: #{tpu_custom_call.1} parent=5 // pred_check_branch
        %779 = sbr.rel (%p777) target = $region105
      $region104: #{tpu_custom_call.1} parent=5 // pred_region
        %s780 = ssub.s32 %s18, 2
        // Predicated region
        $region106: #{tpu_custom_call.1} parent=104 // pred_check
          %p781 = pneg %p262
        $region107: #{tpu_custom_call.1} parent=104 // pred_check_branch
          %783 = sbr.rel (%p781) target = $region109
        $region108: #{tpu_custom_call.1} parent=104 // pred_region
          %s784 = sand.u32 %s247, 1
          %s785 = scalar_lea.sflag [#allocation4], %s784
          %s786 = sand.u32 %s247, 1
          %s787 = smul.addr %s786, 8
          %s788 = scalar_lea.vmem [#allocation3], %s787
          %789 = dma.done %s785, 128
        $region109: #{tpu_custom_call.1} parent=104 // pred_fallthru
          _
      $region105: #{tpu_custom_call.1} parent=5 // pred_fallthru
        _
    $region6: #{tpu_custom_call.1} parent=1 // loop_footer
      %s22 = sadd.s32 1, %s18
    $region7: #{tpu_custom_call.1} parent=1 // loop_footer_branch
      %17 = sbr.rel target = $region3
    $region8: #{tpu_custom_call.1} parent=1 // loop_exit
      _
    %790 = vsyncpa [#allocation4], 1
    %s791 = scalar_lea.sflag [#allocation4], 1
    %792 = vsyncpa %s791, 1

</llo_original>
